<compile_context>
chip_gen: v6e
topology: v6e:2x2x1
jax: 0.10.0
libtpu: 0.0.40
codegen_flags: <defaults>
</compile_context>

<pallas_src>
import functools

import jax
import jax.numpy as jnp
from jax.experimental import pallas as pl
from jax.experimental.pallas import tpu as pltpu

# Older JAX releases spell this TPUCompilerParams.
_CompilerParams = getattr(pltpu, "CompilerParams", None) or getattr(
    pltpu, "TPUCompilerParams")
_Buffered = getattr(pl, "Buffered", None)


def _round_up(x, m):
    return (x + m - 1) // m * m


def _vmem_limit_bytes():
    """~80% of physical VMEM (leaves headroom for Mosaic scratch), or None if unknown."""
    try:
        info = pltpu.get_tpu_info()
        cap = getattr(info, "vmem_capacity_bytes", None)
        if cap:
            return int(cap * 0.8)
    except Exception:
        pass
    return None


def _single_buffered(block_shape, index_map):
    """BlockSpec for a resident operand: constant index_map => DMA'd once, 1 buffer."""
    if _Buffered is not None:
        try:
            return pl.BlockSpec(block_shape, index_map, pipeline_mode=_Buffered(1))
        except TypeError:  # older JAX without pipeline_mode kwarg
            pass
    return pl.BlockSpec(block_shape, index_map)


def _normalize_kernel(scale_ref, img_ref, skl_ref, img_out_ref, skl_out_ref):
    """Row-wise L2 normalize both embeddings; fold logit_scale into the image side.

    scale_ref        : SMEM (1,) f32 logit_scale
    img_ref, skl_ref : (tr, Dp) raw embeddings
    img_out, skl_out : (tr, Dp) mxu_dtype:  scale*img/||img||   and   skl/||skl||
    """
    scale = scale_ref[0]

    def _norm(x_ref, s):
        x = x_ref[...].astype(jnp.float32)
        ss = jnp.sum(x * x, axis=-1, keepdims=True)
        # == s / max(||x||, 1e-12); single EUP rsqrt, no divide.
        inv = jax.lax.rsqrt(jnp.maximum(ss, jnp.float32(1e-24)))
        return x * (inv * s)

    img_out_ref[...] = _norm(img_ref, scale).astype(img_out_ref.dtype)
    skl_out_ref[...] = _norm(skl_ref, jnp.float32(1.0)).astype(skl_out_ref.dtype)


def _ce_block_kernel(n_valid, tq, img_ref, skl_ref, bias_ref, out_ref):
    """Partial cross-entropy sums (both directions) for one block of `tq` anchor rows.

    img_ref : (Bp, Dp) resident, logit_scale-folded, L2-normalized image embeddings
    skl_ref : (Bp, Dp) resident, L2-normalized skeleton embeddings
    bias_ref: (1, Bp)  f32 additive column mask (0 for valid columns, -1e30 for padding)
    out_ref : (1, 1, 2) f32  [...,0] = sum_r lse_image[r]-diag[r]   (valid rows only)
                             [...,1] = sum_r lse_skel[r] -diag[r]
    """
    i = pl.program_id(0)
    bp = img_ref.shape[0]
    r0 = pl.multiple_of(i * tq, tq)

    img_blk = img_ref[pl.ds(r0, tq), :]            # (tq, Dp)
    skl_blk = skl_ref[pl.ds(r0, tq), :]            # (tq, Dp)
    bias = bias_ref[...]                           # (1, Bp)

    # diag[r] = logit_scale * <img_n[r], skl_n[r]>; shared by both directions.  It is an
    # f32 VPU dot of the same (possibly bf16) operands the MXU consumes, so any mismatch
    # with the in-matrix diagonal is bf16-rounding level -- negligible for a loss scalar.
    diag = jnp.sum(img_blk.astype(jnp.float32) * skl_blk.astype(jnp.float32),
                   axis=-1, keepdims=True)         # (tq, 1)

    dn = (((1,), (1,)), ((), ()))                  # contract the feature axis

    def _row_terms(anchor_blk, contrast_full):
        logits = jax.lax.dot_general(anchor_blk, contrast_full, dn,
                                     preferred_element_type=jnp.float32)  # (tq, Bp)
        logits = logits + bias                     # mask padded columns (branch-free)
        m = jnp.max(logits, axis=-1, keepdims=True)
        lse = m + jnp.log(jnp.sum(jnp.exp(logits - m), axis=-1, keepdims=True))
        return lse - diag                          # (tq, 1)

    t_img = _row_terms(img_blk, skl_ref[...])      # image anchors vs all skeletons
    t_skl = _row_terms(skl_blk, img_ref[...])      # skeleton anchors vs all images

    if bp != n_valid:                              # static: zero out padded anchor rows
        row = jax.lax.broadcasted_iota(jnp.int32, (tq, 1), 0) + i * tq
        valid = row < n_valid
        t_img = jnp.where(valid, t_img, jnp.zeros_like(t_img))
        t_skl = jnp.where(valid, t_skl, jnp.zeros_like(t_skl))

    s_img = jnp.sum(t_img, keepdims=True)          # (1, 1)
    s_skl = jnp.sum(t_skl, keepdims=True)          # (1, 1)
    out_ref[...] = jnp.concatenate([s_img, s_skl], axis=1).reshape(1, 1, 2)


def clip_loss(image_embed, skel_embed, logit_scale,
              weight_image=0.5, weight_skel=0.5, mxu_dtype=jnp.bfloat16):
    """Combined CLIP loss scalar (single device: labels = arange(B))."""
    B, D = image_embed.shape
    assert skel_embed.shape == (B, D)

    # Pad the feature dim to full 128-lane width and the batch to a row-tile multiple.
    # Zero padding is exact for the L2 norms and the dot products; padded columns are
    # removed from the logsumexp via an additive bias row, padded rows via a row mask.
    Dp = _round_up(D, 128)
    if B <= 256:
        Bp = _round_up(B, 8)
        tq = Bp
    else:
        tq = 256
        Bp = _round_up(B, tq)

    vmem_limit = _vmem_limit_bytes()
    budget = vmem_limit if vmem_limit is not None else 64 * 1024 * 1024
    mxu_bytes = jnp.dtype(mxu_dtype).itemsize

    def _ce_vmem_estimate(tq_):
        resident = 2 * Bp * Dp * mxu_bytes + Bp * 4   # single-buffered inputs + bias row
        logits = 2 * tq_ * Bp * 4                     # live f32 logits tiles (2 directions)
        return resident + logits

    # Shrink the row tile if the logits temporaries make VMEM tight (keeps Bp % tq == 0).
    while (tq > 128 and tq % 2 == 0 and Bp % (tq // 2) == 0
           and _ce_vmem_estimate(tq) > int(0.7 * budget)):
        tq //= 2
    # TODO(synk): if the resident 2*Bp*Dp alone exceeds the budget (very large B*D on v7x),
    # a column-tiled online-logsumexp path is required; not implemented here.

    img = image_embed
    skl = skel_embed
    if (Bp, Dp) != (B, D):
        img = jnp.pad(img, ((0, Bp - B), (0, Dp - D)))
        skl = jnp.pad(skl, ((0, Bp - B), (0, Dp - D)))

    cp_kwargs = dict(dimension_semantics=("parallel",))
    if vmem_limit is not None:
        cp_kwargs["vmem_limit_bytes"] = vmem_limit
    cp = _CompilerParams(**cp_kwargs)

    grid = (Bp // tq,)
    nblk = Bp // tq
    scale = jnp.asarray(logit_scale, dtype=jnp.float32).reshape(1)

    # --- kernel 1: fused normalization of both embeddings (scale folded, bf16 out) ---
    img_n, skl_n = pl.pallas_call(
        _normalize_kernel,
        out_shape=(jax.ShapeDtypeStruct((Bp, Dp), mxu_dtype),
                   jax.ShapeDtypeStruct((Bp, Dp), mxu_dtype)),
        grid=grid,
        in_specs=[
            pl.BlockSpec(memory_space=pltpu.MemorySpace.SMEM),   # logit_scale (1,)
            pl.BlockSpec((tq, Dp), lambda i: (i, 0)),            # raw image rows
            pl.BlockSpec((tq, Dp), lambda i: (i, 0)),            # raw skeleton rows
        ],
        out_specs=(pl.BlockSpec((tq, Dp), lambda i: (i, 0)),
                   pl.BlockSpec((tq, Dp), lambda i: (i, 0))),
        compiler_params=cp,
    )(scale, img, skl)

    # --- kernel 2: row-blocked dual-direction cross-entropy partial sums ---
    col = jnp.arange(Bp)
    col_bias = jnp.where(col < B, 0.0, -1e30).astype(jnp.float32).reshape(1, Bp)

    cost = pl.CostEstimate(
        flops=4 * Bp * Bp * Dp + 8 * Bp * Bp,
        transcendentals=2 * Bp * Bp,
        bytes_accessed=2 * Bp * Dp * mxu_bytes + Bp * 4 + nblk * 2 * 4)

    def _ce_call(resident_spec_fn):
        return pl.pallas_call(
            functools.partial(_ce_block_kernel, B, tq),
            out_shape=jax.ShapeDtypeStruct((nblk, 1, 2), jnp.float32),
            grid=grid,
            in_specs=[
                resident_spec_fn((Bp, Dp), lambda i: (0, 0)),   # resident scale*image_n
                resident_spec_fn((Bp, Dp), lambda i: (0, 0)),   # resident skel_n
                resident_spec_fn((1, Bp), lambda i: (0, 0)),    # column pad bias
            ],
            out_specs=pl.BlockSpec((1, 1, 2), lambda i: (i, 0, 0)),
            compiler_params=cp,
            cost_estimate=cost,
        )(img_n, skl_n, col_bias)

    try:
        part_sums = _ce_call(_single_buffered)          # preferred: Buffered(1) residents
    except Exception:
        part_sums = _ce_call(pl.BlockSpec)              # fallback: default double-buffering

    sums = jnp.sum(part_sums, axis=(0, 1))              # (2,)
    loss_image = sums[0] / B
    loss_skel = sums[1] / B
    return weight_image * loss_image + weight_skel * loss_skel


def _reference_clip_loss(image_embed, skel_embed, logit_scale,
                         weight_image=0.5, weight_skel=0.5):
    eps = 1e-12
    img_n = image_embed / jnp.maximum(
        jnp.linalg.norm(image_embed, axis=-1, keepdims=True), eps)
    skl_n = skel_embed / jnp.maximum(
        jnp.linalg.norm(skel_embed, axis=-1, keepdims=True), eps)
    logits_i = logit_scale * img_n @ skl_n.T
    logits_s = logit_scale * skl_n @ img_n.T
    labels = jnp.arange(image_embed.shape[0])

    def ce(logits):
        lse = jax.scipy.special.logsumexp(logits, axis=1)
        picked = logits[jnp.arange(logits.shape[0]), labels]
        return jnp.mean(lse - picked)

    return weight_image * ce(logits_i) + weight_skel * ce(logits_s)


if __name__ == "__main__":
    key = jax.random.PRNGKey(0)
    k1, k2 = jax.random.split(key)
    B, D = 8, 32
    # outputs dict from the model
    outputs = {
        "image_embed": jax.random.normal(k1, (B, D), dtype=jnp.float32),
        "skeleton_embed": jax.random.normal(k2, (B, D), dtype=jnp.float32),
        "logit_scale": jnp.float32(1.0 / 0.07),   # CLIP default exp(log(1/0.07))
    }

    # Equal gradient-magnitude weighting (1/g, normalized) => 0.5 / 0.5.
    loss = clip_loss(outputs["image_embed"], outputs["skeleton_embed"],
                     outputs["logit_scale"], 0.5, 0.5)
    loss = jax.block_until_ready(loss)

    ref = _reference_clip_loss(outputs["image_embed"], outputs["skeleton_embed"],
                               outputs["logit_scale"], 0.5, 0.5)
    assert jnp.isfinite(loss), loss
    # bf16 MXU operands + rsqrt normalization => looser than bit-exact f32 ordering; fine
    # for a loss scalar.
    assert jnp.allclose(loss, ref, rtol=2e-2, atol=2e-2), (loss, ref)
    print("KERNEL_OK")
</pallas_src>

<mosaic_0001>
module attributes {stable_mosaic.version = 11 : i64} {
  func.func @_normalize_kernel(%arg0: i32, %arg1: memref<1xf32, #tpu.memory_space<smem>>, %arg2: memref<8x128xf32, #tpu.memory_space<vmem>>, %arg3: memref<8x128xf32, #tpu.memory_space<vmem>>, %arg4: memref<8x128xbf16, #tpu.memory_space<vmem>>, %arg5: memref<8x128xbf16, #tpu.memory_space<vmem>>) attributes {dimension_semantics = [#tpu.dimension_semantics<parallel>], iteration_bounds = array<i64: 1>, scalar_prefetch = 0 : i64, scratch_operands = 0 : i64, tpu.core_type = #tpu.core_type<tc>, window_params = [{transform_indices = @transform_0, window_bounds = array<i64: 1>}, {transform_indices = @transform_1, window_bounds = array<i64: 8, 128>}, {transform_indices = @transform_2, window_bounds = array<i64: 8, 128>}, {transform_indices = @transform_3, window_bounds = array<i64: 8, 128>}, {transform_indices = @transform_4, window_bounds = array<i64: 8, 128>}]} {
    %c0 = arith.constant 0 : index
    %0 = memref.load %arg1[%c0] : memref<1xf32, #tpu.memory_space<smem>>
    %c0_0 = arith.constant 0 : index
    %c0_1 = arith.constant 0 : index
    %1 = vector.load %arg2[%c0_0, %c0_1] : memref<8x128xf32, #tpu.memory_space<vmem>>, vector<8x128xf32>
    %2 = arith.mulf %1, %1 : vector<8x128xf32>
    %cst = arith.constant dense<0.000000e+00> : vector<8xf32>
    %3 = vector.multi_reduction <add>, %2, %cst [1] : vector<8x128xf32> to vector<8xf32>
    %4 = vector.shape_cast %3 : vector<8xf32> to vector<8x1xf32>
    %cst_2 = arith.constant 1.000000e-24 : f32
    %5 = vector.broadcast %cst_2 : f32 to vector<8x1xf32>
    %6 = arith.maximumf %4, %5 : vector<8x1xf32>
    %7 = math.rsqrt %6 : vector<8x1xf32>
    %8 = vector.broadcast %0 : f32 to vector<8x1xf32>
    %9 = arith.mulf %7, %8 : vector<8x1xf32>
    %10 = vector.broadcast %9 : vector<8x1xf32> to vector<8x128xf32>
    %11 = arith.mulf %1, %10 : vector<8x128xf32>
    %12 = arith.truncf %11 : vector<8x128xf32> to vector<8x128xbf16>
    %c0_3 = arith.constant 0 : index
    %c0_4 = arith.constant 0 : index
    %13 = vector.load %arg4[%c0_3, %c0_4] : memref<8x128xbf16, #tpu.memory_space<vmem>>, vector<8x128xbf16>
    tpu.vector_store %arg4[%c0_3, %c0_4], %12 {strides = array<i32>} : memref<8x128xbf16, #tpu.memory_space<vmem>>, vector<8x128xbf16>,
    %c0_5 = arith.constant 0 : index
    %c0_6 = arith.constant 0 : index
    %14 = vector.load %arg3[%c0_5, %c0_6] : memref<8x128xf32, #tpu.memory_space<vmem>>, vector<8x128xf32>
    %15 = arith.mulf %14, %14 : vector<8x128xf32>
    %cst_7 = arith.constant dense<0.000000e+00> : vector<8xf32>
    %16 = vector.multi_reduction <add>, %15, %cst_7 [1] : vector<8x128xf32> to vector<8xf32>
    %17 = vector.shape_cast %16 : vector<8xf32> to vector<8x1xf32>
    %cst_8 = arith.constant 1.000000e-24 : f32
    %18 = vector.broadcast %cst_8 : f32 to vector<8x1xf32>
    %19 = arith.maximumf %17, %18 : vector<8x1xf32>
    %20 = math.rsqrt %19 : vector<8x1xf32>
    %cst_9 = arith.constant 1.000000e+00 : f32
    %21 = vector.broadcast %cst_9 : f32 to vector<8x1xf32>
    %22 = arith.mulf %20, %21 : vector<8x1xf32>
    %23 = vector.broadcast %22 : vector<8x1xf32> to vector<8x128xf32>
    %24 = arith.mulf %14, %23 : vector<8x128xf32>
    %25 = arith.truncf %24 : vector<8x128xf32> to vector<8x128xbf16>
    %c0_10 = arith.constant 0 : index
    %c0_11 = arith.constant 0 : index
    %26 = vector.load %arg5[%c0_10, %c0_11] : memref<8x128xbf16, #tpu.memory_space<vmem>>, vector<8x128xbf16>
    tpu.vector_store %arg5[%c0_10, %c0_11], %25 {strides = array<i32>} : memref<8x128xbf16, #tpu.memory_space<vmem>>, vector<8x128xbf16>,
    return
  }
  func.func @transform_0(%arg0: i32) -> i32 {
    %c0_i32 = arith.constant 0 : i32
    %c0_i32_0 = arith.constant 0 : i32
    return %c0_i32 : i32
  }
  func.func @transform_1(%arg0: i32) -> (i32, i32) {
    %c0_i32 = arith.constant 0 : i32
    %c0_i32_0 = arith.constant 0 : i32
    return %arg0, %c0_i32 : i32, i32
  }
  func.func @transform_2(%arg0: i32) -> (i32, i32) {
    %c0_i32 = arith.constant 0 : i32
    %c0_i32_0 = arith.constant 0 : i32
    return %arg0, %c0_i32 : i32, i32
  }
  func.func @transform_3(%arg0: i32) -> (i32, i32) {
    %c0_i32 = arith.constant 0 : i32
    %c0_i32_0 = arith.constant 0 : i32
    return %arg0, %c0_i32 : i32, i32
  }
  func.func @transform_4(%arg0: i32) -> (i32, i32) {
    %c0_i32 = arith.constant 0 : i32
    %c0_i32_0 = arith.constant 0 : i32
    return %arg0, %c0_i32 : i32, i32
  }
}

</mosaic_0001>

<llo_original>
// kernel: tpu_custom_call.1
$region0: #{tpu_custom_call.1}
  #allocation0 [shape = 'u32[]', space=smem, size = 0x4, offset = 0x4, fixed_abs, tag = 'smem constant byte address 0x4 - core index']
  #allocation1 [shape = 'u32[144,128]{1,0:T(1,128)}', space=vmem, size = 0x12000, scoped, tag = 'internal scratch']
  #allocation2 [shape = 'f32[1]{0:T(128)S(6)}', space=smem, size = 0x200, scoped, tag = 'scoped memory for tpu_custom_call.1']
  %s0 = inlined_call_operand.<no memory space> [shape: f32[1], index: 0, kind: input, shape index: {}]
  %s1 = inlined_call_operand.hbm [shape: f32[8,128], index: 1, kind: input, shape index: {}]
  %s2 = inlined_call_operand.hbm [shape: f32[8,128], index: 2, kind: input, shape index: {}]
  %s3 = inlined_call_operand.hbm [shape: bf16[8,128], index: 3, kind: output, shape index: {0}]
  %s4 = inlined_call_operand.hbm [shape: bf16[8,128], index: 4, kind: output, shape index: {1}]
  %5 = xla_tuple %s3, %s4
  %s6 = sld [smem:[#allocation0]]
  $region38: #{tpu_custom_call.1} parent=0
    _
  %s8 = ssub.s32 1, %s6
  %s9 = scalar_select 0, %s8, %s6
  %10 = sst [smem:[#allocation2]] %s0
  $region1: #{tpu_custom_call.1} parent=0
    #allocation3 [shape = 'u8[4096]{0}', space=vmem, size = 0x1000, scoped, tag = 'input window, operand 1, single buffered']
    #allocation4 [shape = 's32[1]{0}', space=sflag, size = 0x4, scoped, tag = 'scoped memory for tpu_custom_call.1']
    #allocation5 [shape = 's32[1]{0}', space=sflag, size = 0x4, scoped, tag = 'scoped memory for tpu_custom_call.1']
    #allocation6 [shape = 'u8[4096]{0}', space=vmem, size = 0x1000, scoped, tag = 'input window, operand 2, single buffered']
    #allocation7 [shape = 's32[1]{0}', space=sflag, size = 0x4, scoped, tag = 'scoped memory for tpu_custom_call.1']
    #allocation8 [shape = 'u8[2048]{0}', space=vmem, size = 0x800, scoped, tag = 'output window, operand 0, single buffered']
    #allocation9 [shape = 'u8[2048]{0}', space=vmem, size = 0x800, scoped, tag = 'output window, operand 1, single buffered']
    #allocation10 [shape = 's32[1]{0}', space=sflag, size = 0x4, scoped, tag = 'scoped memory for tpu_custom_call.1']
    %11 = vsyncpa [#allocation4], 0
    %12 = vsyncpa [#allocation7], 0
    %13 = vsyncpa [#allocation5], 0
    %14 = vsyncpa [#allocation10], 0
    // Predicated region
    $region2: #{tpu_custom_call.1} parent=1 // pred_check
      _
    $region3: #{tpu_custom_call.1} parent=1 // pred_check_branch
      %16 = sbr.rel (0) target = $region5
    $region4: #{tpu_custom_call.1} parent=1 // pred_region
      _
    $region5: #{tpu_custom_call.1} parent=1 // pred_fallthru
      _
    // Predicated region
    $region6: #{tpu_custom_call.1} parent=1 // pred_check
      _
    $region7: #{tpu_custom_call.1} parent=1 // pred_check_branch
      %18 = sbr.rel (0) target = $region9
    $region8: #{tpu_custom_call.1} parent=1 // pred_region
      %s20 = ssub.s32 128, 128
      %21 = vsyncadd [#allocation4], %s20
      %s23 = sshll.u32 [#allocation3], 4
      %s24 = int_to_ptr.vmem [resolvable:$true] %s23
      %26 = dma.hbm_to_vmem [thread:$0]  %s1, 128, %s24, [#allocation4]
    $region9: #{tpu_custom_call.1} parent=1 // pred_fallthru
      _
    // Predicated region
    $region10: #{tpu_custom_call.1} parent=1 // pred_check
      _
    $region11: #{tpu_custom_call.1} parent=1 // pred_check_branch
      %28 = sbr.rel (0) target = $region13
    $region12: #{tpu_custom_call.1} parent=1 // pred_region
      %s30 = ssub.s32 128, 128
      %31 = vsyncadd [#allocation7], %s30
      %s33 = sshll.u32 [#allocation6], 4
      %s34 = int_to_ptr.vmem [resolvable:$true] %s33
      %36 = dma.hbm_to_vmem [thread:$0]  %s2, 128, %s34, [#allocation7]
    $region13: #{tpu_custom_call.1} parent=1 // pred_fallthru
      _
    // Predicated region
    $region14: #{tpu_custom_call.1} parent=1 // pred_check
      _
    $region15: #{tpu_custom_call.1} parent=1 // pred_check_branch
      %38 = sbr.rel (0) target = $region17
    $region16: #{tpu_custom_call.1} parent=1 // pred_region
      %39 = dma.done [#allocation4], 128
    $region17: #{tpu_custom_call.1} parent=1 // pred_fallthru
      _
    // Predicated region
    $region18: #{tpu_custom_call.1} parent=1 // pred_check
      _
    $region19: #{tpu_custom_call.1} parent=1 // pred_check_branch
      %41 = sbr.rel (0) target = $region21
    $region20: #{tpu_custom_call.1} parent=1 // pred_region
      %42 = dma.done [#allocation7], 128
    $region21: #{tpu_custom_call.1} parent=1 // pred_fallthru
      _
    %s43 = sld [smem:[#allocation2]]
    %v44 = vld [vmem:[#allocation3] sm:$0xff]
    %v45 = vmul.f32 %v44, %v44
    %46 = vadd.xlane.f32.xlu0 %v45
    %v47 = vpop.xlane.xlu0 %46
    %v48 = vmax.f32 %v47, 1e-24
    %v49 = vrsqrt.pop %v48
    %v50 = vstv %s43
    %v51 = vmul.f32 %v49, %v50
    %v52 = vmul.f32 %v44, %v51
    %v53 = vpack.c.bf16 %v52, %v52
    %54 = vst [vmem:[#allocation8] sm:$0xf] %v53
    %v55 = vld [vmem:[#allocation6] sm:$0xff]
    %v56 = vmul.f32 %v55, %v55
    %57 = vadd.xlane.f32.xlu0 %v56
    %v58 = vpop.xlane.xlu0 %57
    %v59 = vmax.f32 %v58, 1e-24
    %v60 = vrsqrt.pop %v59
    %v61 = vmul.f32 %v55, %v60
    %v62 = vpack.c.bf16 %v61, %v61
    %63 = vst [vmem:[#allocation9] sm:$0xf] %v62
    // Predicated region
    $region22: #{tpu_custom_call.1} parent=1 // pred_check
      _
    $region23: #{tpu_custom_call.1} parent=1 // pred_check_branch
      %65 = sbr.rel (0) target = $region25
    $region24: #{tpu_custom_call.1} parent=1 // pred_region
      %s67 = ssub.s32 64, 64
      %68 = vsyncadd [#allocation5], %s67
      %s70 = sshll.u32 [#allocation8], 4
      %s71 = int_to_ptr.vmem [resolvable:$true] %s70
      %73 = dma.vmem_to_hbm [thread:$0]  %s71, 64, %s3, [#allocation5]
    $region25: #{tpu_custom_call.1} parent=1 // pred_fallthru
      _
    // Predicated region
    $region26: #{tpu_custom_call.1} parent=1 // pred_check
      _
    $region27: #{tpu_custom_call.1} parent=1 // pred_check_branch
      %75 = sbr.rel (0) target = $region29
    $region28: #{tpu_custom_call.1} parent=1 // pred_region
      %s77 = ssub.s32 64, 64
      %78 = vsyncadd [#allocation10], %s77
      %s80 = sshll.u32 [#allocation9], 4
      %s81 = int_to_ptr.vmem [resolvable:$true] %s80
      %83 = dma.vmem_to_hbm [thread:$0]  %s81, 64, %s4, [#allocation10]
    $region29: #{tpu_custom_call.1} parent=1 // pred_fallthru
      _
    // Predicated region
    $region30: #{tpu_custom_call.1} parent=1 // pred_check
      _
    $region31: #{tpu_custom_call.1} parent=1 // pred_check_branch
      %85 = sbr.rel (0) target = $region33
    $region32: #{tpu_custom_call.1} parent=1 // pred_region
      %86 = dma.done [#allocation5], 64
    $region33: #{tpu_custom_call.1} parent=1 // pred_fallthru
      _
    // Predicated region
    $region34: #{tpu_custom_call.1} parent=1 // pred_check
      _
    $region35: #{tpu_custom_call.1} parent=1 // pred_check_branch
      %88 = sbr.rel (0) target = $region37
    $region36: #{tpu_custom_call.1} parent=1 // pred_region
      %89 = dma.done [#allocation10], 64
    $region37: #{tpu_custom_call.1} parent=1 // pred_fallthru
      _
    %90 = vsyncpa [#allocation4], 1
    %91 = vsyncpa [#allocation7], 1
    %92 = vsyncpa [#allocation5], 1
    %93 = vsyncpa [#allocation10], 1

</llo_original>
